<compile_context>
chip_gen: v7x
topology: tpu7x:2x2x1
jax: 0.10.0
libtpu: 0.0.40
codegen_flags: <defaults>
</compile_context>

<pallas_src>
import jax
import jax.numpy as jnp
import numpy as np
from jax.experimental import pallas as pl
from jax.experimental.pallas import tpu as pltpu

R = 5  # matches MinMaxLayer(R=5)

# ----------------------------------------------------------------------------
# Sorting network for the 2R = 10 per-row values.
# ----------------------------------------------------------------------------

# Known-optimal 29-comparator, depth-8 network for 10 inputs.
_NET_10_CANDIDATE = [
    (0, 8), (1, 9), (2, 7), (3, 5), (4, 6),
    (0, 2), (1, 4), (5, 8), (7, 9),
    (0, 3), (2, 4), (5, 7), (6, 9),
    (0, 1), (3, 6), (8, 9),
    (1, 5), (2, 3), (4, 8), (6, 7),
    (1, 2), (3, 5), (4, 6), (7, 8),
    (2, 3), (4, 5), (6, 7),
    (3, 4), (5, 6),
]


def _is_sorting_network(net, n):
    """Exhaustive 0-1 principle check (2^n binary vectors)."""
    for bits in range(1 << n):
        w = [(bits >> k) & 1 for k in range(n)]
        ref = sorted(w)
        for i, j in net:
            if w[i] > w[j]:
                w[i], w[j] = w[j], w[i]
        if w != ref:
            return False
    return True


def _suffix_sorts_preordered(pairs, suffix, n):
    """Check `suffix` sorts every 0-1 vector already ordered on `pairs`."""
    for bits in range(1 << n):
        w = [(bits >> k) & 1 for k in range(n)]
        if any(w[a] > w[b] for a, b in pairs):
            continue
        ref = sorted(w)
        for a, b in suffix:
            if w[a] > w[b]:
                w[a], w[b] = w[b], w[a]
        if w != ref:
            return False
    return True


def _batcher_network(n):
    """Batcher odd-even mergesort network for arbitrary n."""
    net = []
    p = 1
    while p < n:
        k = p
        while k >= 1:
            j = k % p
            while j + k < n:
                for i in range(min(k, n - j - k)):
                    if (i + j) // (2 * p) == (i + j + k) // (2 * p):
                        net.append((i + j, i + j + k))
                j += 2 * k
            k //= 2
        p *= 2
    return net


def _bubble_network(n):
    return [(q, q + 1) for p in range(n) for q in range(n - 1 - p)]


_FIRST_LAYER = _NET_10_CANDIDATE[:5]
_SUFFIX = _NET_10_CANDIDATE[5:]

if (_is_sorting_network(_NET_10_CANDIDATE, 2 * R)
        and _suffix_sorts_preordered(_FIRST_LAYER, _SUFFIX, 2 * R)):
    # Each (min_j, max_j) bin pair is pre-ordered; placing the pairs on the
    # first-layer comparator slots lets us drop that layer: 24 comparators.
    _PAIR_SLOTS = list(_FIRST_LAYER)      # (min_slot, max_slot) for bin j
    _SORT_NET = _SUFFIX
else:  # pragma: no cover - defensive fallback if the candidate were invalid
    _net = _batcher_network(2 * R)
    if not _is_sorting_network(_net, 2 * R):
        _net = _bubble_network(2 * R)
    _PAIR_SLOTS = [(2 * j, 2 * j + 1) for j in range(R)]
    _SORT_NET = _net


# ----------------------------------------------------------------------------
# Kernel
# ----------------------------------------------------------------------------

def minmax_kernel(len_ref, x_ref, out_ref):
    # len_ref: (TM, 1)  int32   per-row valid length L_i (contract: 1 <= L <= D)
    # x_ref  : (TM, D)  f32/bf16 padded rows
    # out_ref: (TM, 2R) f32     sorted ascending per row
    x = x_ref[...]
    L = len_ref[...]                                        # (TM, 1)
    pos = jax.lax.broadcasted_iota(jnp.int32, x.shape, 1)   # (TM, D) column idx
    r_pos = pos * R                                         # only (TM,D) int temp

    # Per-row thresholds on the small (TM,1) side (no integer division):
    #   pos >= floor(j*L/R)       <=>  r_pos >= j*L - (R-1)
    #   pos <  ceil((j+1)*L/R)    <=>  r_pos <  (j+1)*L
    ub = [j * L for j in range(1, R + 1)]        # upper thresholds, j = 1..R
    lb = [u - (R - 1) for u in ub[:R - 1]]       # lower thresholds, j = 1..R-1

    # Reusable one-sided tests: 9 compares + 4 ands per element.
    # Bin 0's lower bound (pos >= 0) is trivially true; below[R-1] also
    # excludes the padding (pos >= L).
    below = [r_pos < u for u in ub]
    masks = [below[0]]
    for j in range(1, R):
        masks.append((r_pos >= lb[j - 1]) & below[j])

    neg_inf = jnp.array(-jnp.inf, dtype=x.dtype)
    pos_inf = jnp.array(jnp.inf, dtype=x.dtype)

    mins, maxs = [], []
    for m in masks:
        vmax = jnp.max(jnp.where(m, x, neg_inf), axis=-1, keepdims=True)
        vmin = jnp.min(jnp.where(m, x, pos_inf), axis=-1, keepdims=True)
        maxs.append(vmax.astype(jnp.float32))
        mins.append(vmin.astype(jnp.float32))

    # Place each already-ordered (min_j, max_j) pair on its first-layer
    # comparator slot, then run only the remaining 24 comparators.
    vals = [None] * (2 * R)
    for j, (a, b) in enumerate(_PAIR_SLOTS):
        vals[a], vals[b] = mins[j], maxs[j]
    for a, b in _SORT_NET:
        va, vb = vals[a], vals[b]
        vals[a] = jnp.minimum(va, vb)
        vals[b] = jnp.maximum(va, vb)

    # Single (TM, 2R) store (lane-sparse store is <1% of traffic; low priority).
    out_ref[...] = jnp.concatenate(vals, axis=1).astype(out_ref.dtype)


# ----------------------------------------------------------------------------
# Wrapper
# ----------------------------------------------------------------------------

def _choose_tm(n_rows, sublane=8, cap=256, min_grid=4):
    """Row tile: multiple of `sublane`, capped (v5e scoped-VMEM safe), aiming
    for >= `min_grid` grid steps (v7x dual-TC sharding + pipelining)."""
    best = None
    for t in range(sublane, min(n_rows, cap) + 1, sublane):
        if n_rows % t == 0 and n_rows // t >= min_grid:
            best = t          # largest exact divisor -> no padding needed
    if best is not None:
        return best
    if n_rows <= sublane * min_grid:
        return sublane
    tm = -(-(-(-n_rows // min_grid)) // sublane) * sublane  # round_up(ceil(n/g), sublane)
    return max(sublane, min(cap, tm))


def minmax_layer(x, lengths, *, tm=None, cast_to_bf16=False,
                 vmem_limit_bytes=None):
    """x: (N, D) float32, lengths: (N,) int32 with 1 <= lengths[i] <= D.

    Returns (N, 2R) float32, each row sorted ascending.
    NOTE: rows with lengths == 0 violate the contract (would yield +/-inf).
    """
    N, D = x.shape
    sublane = 16 if cast_to_bf16 else 8      # bf16 sublane tile is (16, 128)
    if tm is None:
        tm = _choose_tm(N, sublane=sublane)
    assert tm % sublane == 0, "tm must be a multiple of the sublane tile"

    # Pad N up to a multiple of tm (pad rows: value 0, length 1 -> benign),
    # instead of falling back to one giant block.
    n_pad = (-N) % tm
    if n_pad:
        x = jnp.concatenate([x, jnp.zeros((n_pad, D), x.dtype)], axis=0)
        lengths = jnp.concatenate(
            [lengths, jnp.ones((n_pad,), lengths.dtype)], axis=0)
    Np = N + n_pad

    if cast_to_bf16:
        # min/max/compares are exact on the bf16-rounded values; sort and
        # output stay in f32.  Opt-in: changes numerics vs. pure f32.
        x = x.astype(jnp.bfloat16)

    lengths2d = lengths.reshape(Np, 1).astype(jnp.int32)

    out = pl.pallas_call(
        minmax_kernel,
        out_shape=jax.ShapeDtypeStruct((Np, 2 * R), jnp.float32),
        grid_spec=pltpu.PrefetchScalarGridSpec(
            num_scalar_prefetch=0,
            grid=(Np // tm,),
            in_specs=[
                pl.BlockSpec((tm, 1), lambda i: (i, 0)),   # lengths
                pl.BlockSpec((tm, D), lambda i: (i, 0)),   # inputs
            ],
            out_specs=pl.BlockSpec((tm, 2 * R), lambda i: (i, 0)),
        ),
        compiler_params=pltpu.CompilerParams(
            dimension_semantics=("parallel",),
            vmem_limit_bytes=vmem_limit_bytes),
    )(lengths2d, x)

    return out[:N] if n_pad else out


# ----------------------------------------------------------------------------
# Reference + test
# ----------------------------------------------------------------------------

def ref_minmax(x, lengths):
    """Pure-numpy reference replicating the PyTorch forward."""
    x = np.asarray(x)
    lengths = np.asarray(lengths)
    out = []
    for i in range(x.shape[0]):
        L = int(lengths[i])
        row = x[i, :L]
        vals = []
        for j in range(R):
            s = (j * L) // R
            e = -((-(j + 1) * L) // R)   # ceil((j+1)*L/R)
            vals.append(row[s:e].max())  # AdaptiveMaxPool1d
            vals.append(row[s:e].min())  # -AdaptiveMaxPool1d(-x)
        out.append(np.sort(np.asarray(vals, dtype=np.float32)))
    return np.stack(out, axis=0)


if __name__ == "__main__":
    key = jax.random.PRNGKey(0)
    kx, kl, kx2, kl2 = jax.random.split(key, 4)

    # Small stand-in for the (N, 1000) spec shape.
    N, D = 16, 64
    x = jax.random.normal(kx, (N, D), dtype=jnp.float32)
    lengths = jax.random.randint(kl, (N,), R, D + 1, dtype=jnp.int32)
    out = minmax_layer(x, lengths)
    jax.block_until_ready(out)
    assert out.shape == (N, 2 * R)
    np.testing.assert_allclose(np.asarray(out), ref_minmax(x, lengths),
                               rtol=1e-6, atol=1e-6)

    # Non-multiple-of-tm N (exercises the pad-and-slice path), short lengths.
    N2, D2 = 19, 100
    x2 = jax.random.normal(kx2, (N2, D2), dtype=jnp.float32)
    lengths2 = jax.random.randint(kl2, (N2,), 1, D2 + 1, dtype=jnp.int32)
    out2 = minmax_layer(x2, lengths2)
    jax.block_until_ready(out2)
    assert out2.shape == (N2, 2 * R)
    np.testing.assert_allclose(np.asarray(out2), ref_minmax(x2, lengths2),
                               rtol=1e-6, atol=1e-6)

    print("KERNEL_OK")
</pallas_src>

<mosaic_0001>
module attributes {stable_mosaic.version = 11 : i64} {
  func.func @minmax_kernel(%arg0: i32, %arg1: memref<8x1xi32, #tpu.memory_space<vmem>>, %arg2: memref<8x64xf32, #tpu.memory_space<vmem>>, %arg3: memref<8x10xf32, #tpu.memory_space<vmem>>) attributes {dimension_semantics = [#tpu.dimension_semantics<parallel>], iteration_bounds = array<i64: 2>, scalar_prefetch = 0 : i64, scratch_operands = 0 : i64, tpu.core_type = #tpu.core_type<tc>, window_params = [{transform_indices = @transform_0, window_bounds = array<i64: 8, 1>}, {transform_indices = @transform_1, window_bounds = array<i64: 8, 64>}, {transform_indices = @transform_2, window_bounds = array<i64: 8, 10>}]} {
    %c0 = arith.constant 0 : index
    %c0_0 = arith.constant 0 : index
    %0 = vector.load %arg2[%c0, %c0_0] : memref<8x64xf32, #tpu.memory_space<vmem>>, vector<8x64xf32>
    %c0_1 = arith.constant 0 : index
    %c0_2 = arith.constant 0 : index
    %1 = vector.load %arg1[%c0_1, %c0_2] : memref<8x1xi32, #tpu.memory_space<vmem>>, vector<8x1xi32>
    %2 = tpu.iota {dimensions = array<i32: 1>} : vector<8x64xi32>
    %c5_i32 = arith.constant 5 : i32
    %3 = vector.broadcast %c5_i32 : i32 to vector<8x64xi32>
    %4 = arith.muli %2, %3 : vector<8x64xi32>
    %c1_i32 = arith.constant 1 : i32
    %5 = vector.broadcast %c1_i32 : i32 to vector<8x1xi32>
    %6 = arith.muli %5, %1 : vector<8x1xi32>
    %c2_i32 = arith.constant 2 : i32
    %7 = vector.broadcast %c2_i32 : i32 to vector<8x1xi32>
    %8 = arith.muli %7, %1 : vector<8x1xi32>
    %c3_i32 = arith.constant 3 : i32
    %9 = vector.broadcast %c3_i32 : i32 to vector<8x1xi32>
    %10 = arith.muli %9, %1 : vector<8x1xi32>
    %c4_i32 = arith.constant 4 : i32
    %11 = vector.broadcast %c4_i32 : i32 to vector<8x1xi32>
    %12 = arith.muli %11, %1 : vector<8x1xi32>
    %c5_i32_3 = arith.constant 5 : i32
    %13 = vector.broadcast %c5_i32_3 : i32 to vector<8x1xi32>
    %14 = arith.muli %13, %1 : vector<8x1xi32>
    %c4_i32_4 = arith.constant 4 : i32
    %15 = vector.broadcast %c4_i32_4 : i32 to vector<8x1xi32>
    %16 = arith.subi %6, %15 : vector<8x1xi32>
    %c4_i32_5 = arith.constant 4 : i32
    %17 = vector.broadcast %c4_i32_5 : i32 to vector<8x1xi32>
    %18 = arith.subi %8, %17 : vector<8x1xi32>
    %c4_i32_6 = arith.constant 4 : i32
    %19 = vector.broadcast %c4_i32_6 : i32 to vector<8x1xi32>
    %20 = arith.subi %10, %19 : vector<8x1xi32>
    %c4_i32_7 = arith.constant 4 : i32
    %21 = vector.broadcast %c4_i32_7 : i32 to vector<8x1xi32>
    %22 = arith.subi %12, %21 : vector<8x1xi32>
    %23 = vector.broadcast %6 : vector<8x1xi32> to vector<8x64xi32>
    %24 = arith.cmpi slt, %4, %23 : vector<8x64xi32>
    %25 = vector.broadcast %8 : vector<8x1xi32> to vector<8x64xi32>
    %26 = arith.cmpi slt, %4, %25 : vector<8x64xi32>
    %27 = vector.broadcast %10 : vector<8x1xi32> to vector<8x64xi32>
    %28 = arith.cmpi slt, %4, %27 : vector<8x64xi32>
    %29 = vector.broadcast %12 : vector<8x1xi32> to vector<8x64xi32>
    %30 = arith.cmpi slt, %4, %29 : vector<8x64xi32>
    %31 = vector.broadcast %14 : vector<8x1xi32> to vector<8x64xi32>
    %32 = arith.cmpi slt, %4, %31 : vector<8x64xi32>
    %33 = vector.broadcast %16 : vector<8x1xi32> to vector<8x64xi32>
    %34 = arith.cmpi sge, %4, %33 : vector<8x64xi32>
    %35 = arith.andi %34, %26 : vector<8x64xi1>
    %36 = vector.broadcast %18 : vector<8x1xi32> to vector<8x64xi32>
    %37 = arith.cmpi sge, %4, %36 : vector<8x64xi32>
    %38 = arith.andi %37, %28 : vector<8x64xi1>
    %39 = vector.broadcast %20 : vector<8x1xi32> to vector<8x64xi32>
    %40 = arith.cmpi sge, %4, %39 : vector<8x64xi32>
    %41 = arith.andi %40, %30 : vector<8x64xi1>
    %42 = vector.broadcast %22 : vector<8x1xi32> to vector<8x64xi32>
    %43 = arith.cmpi sge, %4, %42 : vector<8x64xi32>
    %44 = arith.andi %43, %32 : vector<8x64xi1>
    %cst = arith.constant 0xFF800000 : f32
    %45 = vector.broadcast %cst : f32 to vector<8x64xf32>
    %46 = arith.select %24, %0, %45 : vector<8x64xi1>, vector<8x64xf32>
    %cst_8 = arith.constant dense<0xFF800000> : vector<8xf32>
    %47 = vector.multi_reduction <maximumf>, %46, %cst_8 [1] : vector<8x64xf32> to vector<8xf32>
    %48 = vector.shape_cast %47 : vector<8xf32> to vector<8x1xf32>
    %cst_9 = arith.constant 0x7F800000 : f32
    %49 = vector.broadcast %cst_9 : f32 to vector<8x64xf32>
    %50 = arith.select %24, %0, %49 : vector<8x64xi1>, vector<8x64xf32>
    %cst_10 = arith.constant dense<0x7F800000> : vector<8xf32>
    %51 = vector.multi_reduction <minimumf>, %50, %cst_10 [1] : vector<8x64xf32> to vector<8xf32>
    %52 = vector.shape_cast %51 : vector<8xf32> to vector<8x1xf32>
    %cst_11 = arith.constant 0xFF800000 : f32
    %53 = vector.broadcast %cst_11 : f32 to vector<8x64xf32>
    %54 = arith.select %35, %0, %53 : vector<8x64xi1>, vector<8x64xf32>
    %cst_12 = arith.constant dense<0xFF800000> : vector<8xf32>
    %55 = vector.multi_reduction <maximumf>, %54, %cst_12 [1] : vector<8x64xf32> to vector<8xf32>
    %56 = vector.shape_cast %55 : vector<8xf32> to vector<8x1xf32>
    %cst_13 = arith.constant 0x7F800000 : f32
    %57 = vector.broadcast %cst_13 : f32 to vector<8x64xf32>
    %58 = arith.select %35, %0, %57 : vector<8x64xi1>, vector<8x64xf32>
    %cst_14 = arith.constant dense<0x7F800000> : vector<8xf32>
    %59 = vector.multi_reduction <minimumf>, %58, %cst_14 [1] : vector<8x64xf32> to vector<8xf32>
    %60 = vector.shape_cast %59 : vector<8xf32> to vector<8x1xf32>
    %cst_15 = arith.constant 0xFF800000 : f32
    %61 = vector.broadcast %cst_15 : f32 to vector<8x64xf32>
    %62 = arith.select %38, %0, %61 : vector<8x64xi1>, vector<8x64xf32>
    %cst_16 = arith.constant dense<0xFF800000> : vector<8xf32>
    %63 = vector.multi_reduction <maximumf>, %62, %cst_16 [1] : vector<8x64xf32> to vector<8xf32>
    %64 = vector.shape_cast %63 : vector<8xf32> to vector<8x1xf32>
    %cst_17 = arith.constant 0x7F800000 : f32
    %65 = vector.broadcast %cst_17 : f32 to vector<8x64xf32>
    %66 = arith.select %38, %0, %65 : vector<8x64xi1>, vector<8x64xf32>
    %cst_18 = arith.constant dense<0x7F800000> : vector<8xf32>
    %67 = vector.multi_reduction <minimumf>, %66, %cst_18 [1] : vector<8x64xf32> to vector<8xf32>
    %68 = vector.shape_cast %67 : vector<8xf32> to vector<8x1xf32>
    %cst_19 = arith.constant 0xFF800000 : f32
    %69 = vector.broadcast %cst_19 : f32 to vector<8x64xf32>
    %70 = arith.select %41, %0, %69 : vector<8x64xi1>, vector<8x64xf32>
    %cst_20 = arith.constant dense<0xFF800000> : vector<8xf32>
    %71 = vector.multi_reduction <maximumf>, %70, %cst_20 [1] : vector<8x64xf32> to vector<8xf32>
    %72 = vector.shape_cast %71 : vector<8xf32> to vector<8x1xf32>
    %cst_21 = arith.constant 0x7F800000 : f32
    %73 = vector.broadcast %cst_21 : f32 to vector<8x64xf32>
    %74 = arith.select %41, %0, %73 : vector<8x64xi1>, vector<8x64xf32>
    %cst_22 = arith.constant dense<0x7F800000> : vector<8xf32>
    %75 = vector.multi_reduction <minimumf>, %74, %cst_22 [1] : vector<8x64xf32> to vector<8xf32>
    %76 = vector.shape_cast %75 : vector<8xf32> to vector<8x1xf32>
    %cst_23 = arith.constant 0xFF800000 : f32
    %77 = vector.broadcast %cst_23 : f32 to vector<8x64xf32>
    %78 = arith.select %44, %0, %77 : vector<8x64xi1>, vector<8x64xf32>
    %cst_24 = arith.constant dense<0xFF800000> : vector<8xf32>
    %79 = vector.multi_reduction <maximumf>, %78, %cst_24 [1] : vector<8x64xf32> to vector<8xf32>
    %80 = vector.shape_cast %79 : vector<8xf32> to vector<8x1xf32>
    %cst_25 = arith.constant 0x7F800000 : f32
    %81 = vector.broadcast %cst_25 : f32 to vector<8x64xf32>
    %82 = arith.select %44, %0, %81 : vector<8x64xi1>, vector<8x64xf32>
    %cst_26 = arith.constant dense<0x7F800000> : vector<8xf32>
    %83 = vector.multi_reduction <minimumf>, %82, %cst_26 [1] : vector<8x64xf32> to vector<8xf32>
    %84 = vector.shape_cast %83 : vector<8xf32> to vector<8x1xf32>
    %85 = arith.minimumf %52, %68 : vector<8x1xf32>
    %86 = arith.maximumf %52, %68 : vector<8x1xf32>
    %87 = arith.minimumf %60, %84 : vector<8x1xf32>
    %88 = arith.maximumf %60, %84 : vector<8x1xf32>
    %89 = arith.minimumf %72, %48 : vector<8x1xf32>
    %90 = arith.maximumf %72, %48 : vector<8x1xf32>
    %91 = arith.minimumf %64, %56 : vector<8x1xf32>
    %92 = arith.maximumf %64, %56 : vector<8x1xf32>
    %93 = arith.minimumf %85, %76 : vector<8x1xf32>
    %94 = arith.maximumf %85, %76 : vector<8x1xf32>
    %95 = arith.minimumf %86, %88 : vector<8x1xf32>
    %96 = arith.maximumf %86, %88 : vector<8x1xf32>
    %97 = arith.minimumf %89, %91 : vector<8x1xf32>
    %98 = arith.maximumf %89, %91 : vector<8x1xf32>
    %99 = arith.minimumf %80, %92 : vector<8x1xf32>
    %100 = arith.maximumf %80, %92 : vector<8x1xf32>
    %101 = arith.minimumf %93, %87 : vector<8x1xf32>
    %102 = arith.maximumf %93, %87 : vector<8x1xf32>
    %103 = arith.minimumf %94, %99 : vector<8x1xf32>
    %104 = arith.maximumf %94, %99 : vector<8x1xf32>
    %105 = arith.minimumf %90, %100 : vector<8x1xf32>
    %106 = arith.maximumf %90, %100 : vector<8x1xf32>
    %107 = arith.minimumf %102, %97 : vector<8x1xf32>
    %108 = arith.maximumf %102, %97 : vector<8x1xf32>
    %109 = arith.minimumf %95, %103 : vector<8x1xf32>
    %110 = arith.maximumf %95, %103 : vector<8x1xf32>
    %111 = arith.minimumf %96, %105 : vector<8x1xf32>
    %112 = arith.maximumf %96, %105 : vector<8x1xf32>
    %113 = arith.minimumf %104, %98 : vector<8x1xf32>
    %114 = arith.maximumf %104, %98 : vector<8x1xf32>
    %115 = arith.minimumf %107, %109 : vector<8x1xf32>
    %116 = arith.maximumf %107, %109 : vector<8x1xf32>
    %117 = arith.minimumf %110, %108 : vector<8x1xf32>
    %118 = arith.maximumf %110, %108 : vector<8x1xf32>
    %119 = arith.minimumf %111, %113 : vector<8x1xf32>
    %120 = arith.maximumf %111, %113 : vector<8x1xf32>
    %121 = arith.minimumf %114, %112 : vector<8x1xf32>
    %122 = arith.maximumf %114, %112 : vector<8x1xf32>
    %123 = arith.minimumf %116, %117 : vector<8x1xf32>
    %124 = arith.maximumf %116, %117 : vector<8x1xf32>
    %125 = arith.minimumf %119, %118 : vector<8x1xf32>
    %126 = arith.maximumf %119, %118 : vector<8x1xf32>
    %127 = arith.minimumf %120, %121 : vector<8x1xf32>
    %128 = arith.maximumf %120, %121 : vector<8x1xf32>
    %129 = arith.minimumf %124, %125 : vector<8x1xf32>
    %130 = arith.maximumf %124, %125 : vector<8x1xf32>
    %131 = arith.minimumf %126, %127 : vector<8x1xf32>
    %132 = arith.maximumf %126, %127 : vector<8x1xf32>
    %133 = tpu.concatenate %101, %115, %123, %129, %130, %131, %132, %128, %122, %106 in 1 : vector<8x1xf32>, vector<8x1xf32>, vector<8x1xf32>, vector<8x1xf32>, vector<8x1xf32>, vector<8x1xf32>, vector<8x1xf32>, vector<8x1xf32>, vector<8x1xf32>, vector<8x1xf32> -> vector<8x10xf32>
    %c0_27 = arith.constant 0 : index
    %c0_28 = arith.constant 0 : index
    %134 = vector.load %arg3[%c0_27, %c0_28] : memref<8x10xf32, #tpu.memory_space<vmem>>, vector<8x10xf32>
    tpu.vector_store %arg3[%c0_27, %c0_28], %133 {strides = array<i32>} : memref<8x10xf32, #tpu.memory_space<vmem>>, vector<8x10xf32>,
    return
  }
  func.func @transform_0(%arg0: i32) -> (i32, i32) {
    %c0_i32 = arith.constant 0 : i32
    %c0_i32_0 = arith.constant 0 : i32
    return %arg0, %c0_i32 : i32, i32
  }
  func.func @transform_1(%arg0: i32) -> (i32, i32) {
    %c0_i32 = arith.constant 0 : i32
    %c0_i32_0 = arith.constant 0 : i32
    return %arg0, %c0_i32 : i32, i32
  }
  func.func @transform_2(%arg0: i32) -> (i32, i32) {
    %c0_i32 = arith.constant 0 : i32
    %c0_i32_0 = arith.constant 0 : i32
    return %arg0, %c0_i32 : i32, i32
  }
}

</mosaic_0001>

<llo_original>
// kernel: tpu_custom_call.1
$region0: #{tpu_custom_call.1}
  #allocation0 [shape = 'u32[]', space=smem, size = 0x4, offset = 0x4, fixed_abs, tag = 'smem constant byte address 0x4 - core index']
  #allocation1 [shape = 'u32[144,128]{1,0:T(1,128)}', space=vmem, size = 0x12000, scoped, tag = 'internal scratch']
  %s0 = inlined_call_operand.vmem [shape: s32[16,1], index: 0, kind: input, shape index: {}]
  %s1 = inlined_call_operand.vmem [shape: f32[16,64], index: 1, kind: input, shape index: {}]
  %s2 = inlined_call_operand.hbm [shape: f32[16,10], index: 2, kind: output, shape index: {}]
  %s3 = sld [smem:[#allocation0]]
  $region41: #{tpu_custom_call.1} parent=0
    _
  %s5 = ssub.s32 1, %s3
  %s6 = scalar_select 0, %s5, %s3
  $region1: #{tpu_custom_call.1} parent=0
    #allocation2 [shape = 'u8[8192]{0}', space=vmem, size = 0x2000, scoped, tag = 'output window, operand 0']
    #allocation3 [shape = 's32[2]{0}', space=sflag, size = 0x8, scoped, tag = 'scoped memory for tpu_custom_call.1']
    %7 = vsyncpa [#allocation3], 0
    %s8 = scalar_lea.sflag [#allocation3], 1
    %9 = vsyncpa %s8, 0
    loop: start=0, step=1, limit=4
    $region2: #{tpu_custom_call.1} parent=1 // loop_pre_header
      _
    $region3: #{tpu_custom_call.1} parent=1 // loop_header
      %s11 = sphi 0, %s15
      %p12 = scmp.ge.s32.totalorder %s11, 4
      %s21 = sphi 0, %s23
      %s24 = sphi 0, %s21
      %s25 = sphi 0, %s24
      %s41 = sphi 0, %s25
      %s47 = sphi 0, %s49
      %s50 = sphi 0, %s47
      %s51 = sphi 0, %s50
      %s67 = sphi 0, %s51
      %s73 = sphi 0, %s75
      %s76 = sphi 0, %s73
      %s77 = sphi 0, %s76
      %s93 = sphi 0, %s77
    $region4: #{tpu_custom_call.1} parent=1 // loop_header_branch
      %14 = sbr.rel (%p12) target = $region8
    $region5: #{tpu_custom_call.1} parent=1 // loop_body
      %s16 = ssub.s32 %s11, 1
      %s17 = ssub.s32 %s11, 2
      %s18 = sadd.s32 %s11, 1
      %s19 = ssub.s32 %s11, %s18
      %p20 = scmp.eq.s32.totalorder %s19, 0
      %s22 = sadd.s32 %s21, 1
      %s23 = scalar_select %p20, %s21, %s22
      %p26 = pneg %p20
      %p27 = scmp.eq.s32.totalorder %s11, 1
      %p28 = por %p26, %p27
      %p29 = scmp.ne.s32.totalorder %s21, %s24
      %p30 = scmp.eq.s32.totalorder %s11, 0
      %p31 = por %p29, %p30
      %p32 = scmp.ne.s32.totalorder %s21, %s24
      %p33 = scmp.eq.s32.totalorder %s16, 1
      %p34 = por %p32, %p33
      %p35 = scmp.ne.s32.totalorder %s24, %s25
      %p36 = scmp.eq.s32.totalorder %s16, 0
      %p37 = por %p35, %p36
      %p38 = scmp.ne.s32.totalorder %s24, %s25
      %p39 = scmp.eq.s32.totalorder %s17, 1
      %p40 = por %p38, %p39
      %p42 = scmp.ne.s32.totalorder %s25, %s41
      %p43 = scmp.eq.s32.totalorder %s17, 0
      %p44 = por %p42, %p43
      %s45 = ssub.s32 %s11, %s18
      %p46 = scmp.eq.s32.totalorder %s45, 0
      %s48 = sadd.s32 %s47, 1
      %s49 = scalar_select %p46, %s47, %s48
      %p52 = pneg %p46
      %p53 = scmp.eq.s32.totalorder %s11, 1
      %p54 = por %p52, %p53
      %p55 = scmp.ne.s32.totalorder %s47, %s50
      %p56 = scmp.eq.s32.totalorder %s11, 0
      %p57 = por %p55, %p56
      %p58 = scmp.ne.s32.totalorder %s47, %s50
      %p59 = scmp.eq.s32.totalorder %s16, 1
      %p60 = por %p58, %p59
      %p61 = scmp.ne.s32.totalorder %s50, %s51
      %p62 = scmp.eq.s32.totalorder %s16, 0
      %p63 = por %p61, %p62
      %p64 = scmp.ne.s32.totalorder %s50, %s51
      %p65 = scmp.eq.s32.totalorder %s17, 1
      %p66 = por %p64, %p65
      %p68 = scmp.ne.s32.totalorder %s51, %s67
      %p69 = scmp.eq.s32.totalorder %s17, 0
      %p70 = por %p68, %p69
      %s71 = ssub.s32 %s11, %s18
      %p72 = scmp.eq.s32.totalorder %s71, 0
      %s74 = sadd.s32 %s73, 1
      %s75 = scalar_select %p72, %s73, %s74
      %p78 = pneg %p72
      %p79 = scmp.eq.s32.totalorder %s11, 1
      %p80 = por %p78, %p79
      %p81 = scmp.ne.s32.totalorder %s73, %s76
      %p82 = scmp.eq.s32.totalorder %s11, 0
      %p83 = por %p81, %p82
      %p84 = scmp.ne.s32.totalorder %s73, %s76
      %p85 = scmp.eq.s32.totalorder %s16, 1
      %p86 = por %p84, %p85
      %p87 = scmp.ne.s32.totalorder %s76, %s77
      %p88 = scmp.eq.s32.totalorder %s16, 0
      %p89 = por %p87, %p88
      %p90 = scmp.ne.s32.totalorder %s76, %s77
      %p91 = scmp.eq.s32.totalorder %s17, 1
      %p92 = por %p90, %p91
      %p94 = scmp.ne.s32.totalorder %s77, %s93
      %p95 = scmp.eq.s32.totalorder %s17, 0
      %p96 = por %p94, %p95
      %p97 = scmp.le.s32.totalorder 1, %s11
      %p98 = scmp.lt.s32.totalorder %s11, 3
      %p99 = pnand %p97, %p98
      %p100 = pneg %p99
      // Predicated region
      $region9: #{tpu_custom_call.1} parent=5 // pred_check
        _
      $region10: #{tpu_custom_call.1} parent=5 // pred_check_branch
        %102 = sbr.rel (%p99) target = $region12
      $region11: #{tpu_custom_call.1} parent=5 // pred_region
        %s103 = ssub.s32 %s11, 1
      $region12: #{tpu_custom_call.1} parent=5 // pred_fallthru
        _
      %p104 = scmp.lt.s32.totalorder %s11, 2
      // Predicated region
      $region13: #{tpu_custom_call.1} parent=5 // pred_check
        %p105 = pneg %p104
      $region14: #{tpu_custom_call.1} parent=5 // pred_check_branch
        %107 = sbr.rel (%p105) target = $region16
      $region15: #{tpu_custom_call.1} parent=5 // pred_region
        // Predicated region
        $region17: #{tpu_custom_call.1} parent=15 // pred_check
          %p108 = pneg %p31
        $region18: #{tpu_custom_call.1} parent=15 // pred_check_branch
          %110 = sbr.rel (%p108) target = $region20
        $region19: #{tpu_custom_call.1} parent=15 // pred_region
          %p111 = scmp.lt.s32.totalorder %s11, 1
          %s112 = scalar_select %p111, %s11, 1
          %s113 = smul.addr %s112, 8
          %s114 = scalar_lea.vmem %s0, %s113
        $region20: #{tpu_custom_call.1} parent=15 // pred_fallthru
          _
        // Predicated region
        $region21: #{tpu_custom_call.1} parent=15 // pred_check
          %p115 = pneg %p57
        $region22: #{tpu_custom_call.1} parent=15 // pred_check_branch
          %117 = sbr.rel (%p115) target = $region24
        $region23: #{tpu_custom_call.1} parent=15 // pred_region
          %p118 = scmp.lt.s32.totalorder %s11, 1
          %s119 = scalar_select %p118, %s11, 1
          %s120 = smul.addr %s119, 8
          %s121 = scalar_lea.vmem %s1, %s120
        $region24: #{tpu_custom_call.1} parent=15 // pred_fallthru
          _
      $region16: #{tpu_custom_call.1} parent=5 // pred_fallthru
        _
      %p122 = scmp.le.s32.totalorder 1, %s11
      %p123 = scmp.lt.s32.totalorder %s11, 3
      %p124 = pnand %p122, %p123
      %p125 = pneg %p124
      // Predicated region
      $region25: #{tpu_custom_call.1} parent=5 // pred_check
        _
      $region26: #{tpu_custom_call.1} parent=5 // pred_check_branch
        %127 = sbr.rel (%p124) target = $region28
      $region27: #{tpu_custom_call.1} parent=5 // pred_region
        %s128 = ssub.s32 %s11, 1
        %p129 = scmp.lt.s32.totalorder %s16, 1
        %s130 = scalar_select %p129, %s16, 1
        %s131 = smul.addr %s130, 8
        %s132 = scalar_lea.vmem %s0, %s131
        %p133 = pneg %p37
        %p134 = pneg %p34
        %p135 = scmp.lt.s32.totalorder %s16, 1
        %s136 = scalar_select %p135, %s16, 1
        %s137 = smul.addr %s136, 8
        %s138 = scalar_lea.vmem %s1, %s137
        %p139 = pneg %p63
        %p140 = pneg %p60
        %p141 = pneg %p89
        %p142 = pneg %p86
        %s143 = sand.u32 %s76, 1
        %s144 = scalar_lea.sflag [#allocation3], %s143
        %s145 = sand.u32 %s76, 1
        %s146 = smul.addr %s145, 8
        %s147 = scalar_lea.vmem [#allocation2], %s146
        %p148 = scmp.lt.s32.totalorder %s16, 1
        %s149 = scalar_select %p148, %s16, 1
        %s150 = smul.addr %s149, 8
        %s151 = scalar_lea.vmem %s0, %s150
        %p152 = scmp.lt.s32.totalorder %s16, 1
        %s153 = scalar_select %p152, %s16, 1
        %s154 = smul.addr %s153, 8
        %s155 = scalar_lea.vmem %s1, %s154
        %v156 = vld [vmem:[%s155] sm:$0xff]
        %v157 = vld [vmem:[%s151] sm:$0xff]
        %v158 = vlaneseq
        %v159 = vand.u32 %v158, 127
        %v160 = vmul.u32 %v159, 5
        %v161 = vmul.u32 %v157, 2
        %v162 = vmul.u32 %v157, 3
        %v163 = vmul.u32 %v157, 4
        %v164 = vmul.u32 %v157, 5
        %v165 = vsub.s32 %v157, 4
        %v166 = vsub.s32 %v161, 4
        %v167 = vsub.s32 %v162, 4
        %v168 = vsub.s32 %v163, 4
        %169 = vset.pattern.permute.xlu0 0
        %170 = vperm.xlu0 %169, %v157
        %v171 = vpop.permute.xlu0 %170
        %vm172 = vcmp.lt.s32.totalorder %v160, %v171
        %173 = vset.pattern.permute.xlu0 0
        %174 = vperm.xlu0 %173, %v161
        %v175 = vpop.permute.xlu0 %174
        %vm176 = vcmp.lt.s32.totalorder %v160, %v175
        %177 = vset.pattern.permute.xlu0 0
        %178 = vperm.xlu0 %177, %v162
        %v179 = vpop.permute.xlu0 %178
        %vm180 = vcmp.lt.s32.totalorder %v160, %v179
        %181 = vset.pattern.permute.xlu0 0
        %182 = vperm.xlu0 %181, %v163
        %v183 = vpop.permute.xlu0 %182
        %vm184 = vcmp.lt.s32.totalorder %v160, %v183
        %185 = vset.pattern.permute.xlu0 0
        %186 = vperm.xlu0 %185, %v164
        %v187 = vpop.permute.xlu0 %186
        %vm188 = vcmp.lt.s32.totalorder %v160, %v187
        %189 = vset.pattern.permute.xlu0 0
        %190 = vperm.xlu0 %189, %v165
        %v191 = vpop.permute.xlu0 %190
        %vm192 = vcmp.ge.s32.totalorder %v160, %v191
        %vm193 = vmand %vm192, %vm176
        %194 = vset.pattern.permute.xlu0 0
        %195 = vperm.xlu0 %194, %v166
        %v196 = vpop.permute.xlu0 %195
        %vm197 = vcmp.ge.s32.totalorder %v160, %v196
        %vm198 = vmand %vm197, %vm180
        %199 = vset.pattern.permute.xlu0 0
        %200 = vperm.xlu0 %199, %v167
        %v201 = vpop.permute.xlu0 %200
        %vm202 = vcmp.ge.s32.totalorder %v160, %v201
        %vm203 = vmand %vm202, %vm184
        %204 = vset.pattern.permute.xlu0 0
        %205 = vperm.xlu0 %204, %v168
        %v206 = vpop.permute.xlu0 %205
        %vm207 = vcmp.ge.s32.totalorder %v160, %v206
        %vm208 = vmand %vm207, %vm188
        %v209 = vsel %vm172, %v156, -inf
        %vm210 = vcmask 523264
        %v211 = vsel %vm210, %v209, -inf
        %212 = vmax.xlane.f32.xlu0 %v211
        %v213 = vpop.xlane.xlu0 %212
        %v214 = vsel %vm172, %v156, inf
        %v215 = vsel %vm210, %v214, inf
        %216 = vmin.xlane.f32.xlu0 %v215
        %v217 = vpop.xlane.xlu0 %216
        %v218 = vsel %vm193, %v156, -inf
        %v219 = vsel %vm210, %v218, -inf
        %220 = vmax.xlane.f32.xlu0 %v219
        %v221 = vpop.xlane.xlu0 %220
        %v222 = vsel %vm193, %v156, inf
        %v223 = vsel %vm210, %v222, inf
        %224 = vmin.xlane.f32.xlu0 %v223
        %v225 = vpop.xlane.xlu0 %224
        %v226 = vsel %vm198, %v156, -inf
        %v227 = vsel %vm210, %v226, -inf
        %228 = vmax.xlane.f32.xlu0 %v227
        %v229 = vpop.xlane.xlu0 %228
        %v230 = vsel %vm198, %v156, inf
        %v231 = vsel %vm210, %v230, inf
        %232 = vmin.xlane.f32.xlu0 %v231
        %v233 = vpop.xlane.xlu0 %232
        %v234 = vsel %vm203, %v156, -inf
        %v235 = vsel %vm210, %v234, -inf
        %236 = vmax.xlane.f32.xlu0 %v235
        %v237 = vpop.xlane.xlu0 %236
        %v238 = vsel %vm203, %v156, inf
        %v239 = vsel %vm210, %v238, inf
        %240 = vmin.xlane.f32.xlu0 %v239
        %v241 = vpop.xlane.xlu0 %240
        %v242 = vsel %vm208, %v156, -inf
        %v243 = vsel %vm210, %v242, -inf
        %244 = vmax.xlane.f32.xlu0 %v243
        %v245 = vpop.xlane.xlu0 %244
        %v246 = vsel %vm208, %v156, inf
        %v247 = vsel %vm210, %v246, inf
        %248 = vmin.xlane.f32.xlu0 %v247
        %v249 = vpop.xlane.xlu0 %248
        %v250 = vmin.f32 %v217, %v233
        %v251 = vmax.f32 %v217, %v233
        %v252 = vmin.f32 %v225, %v249
        %v253 = vmax.f32 %v225, %v249
        %v254 = vmin.f32 %v237, %v213
        %v255 = vmax.f32 %v237, %v213
        %v256 = vmin.f32 %v229, %v221
        %v257 = vmax.f32 %v229, %v221
        %v258 = vmin.f32 %v250, %v241
        %v259 = vmax.f32 %v250, %v241
        %v260 = vmin.f32 %v251, %v253
        %v261 = vmax.f32 %v251, %v253
        %v262 = vmin.f32 %v254, %v256
        %v263 = vmax.f32 %v254, %v256
        %v264 = vmin.f32 %v245, %v257
        %v265 = vmax.f32 %v245, %v257
        %v266 = vmin.f32 %v258, %v252
        %v267 = vmax.f32 %v258, %v252
        %v268 = vmin.f32 %v259, %v264
        %v269 = vmax.f32 %v259, %v264
        %v270 = vmin.f32 %v255, %v265
        %v271 = vmax.f32 %v255, %v265
        %v272 = vmin.f32 %v267, %v262
        %v273 = vmax.f32 %v267, %v262
        %v274 = vmin.f32 %v260, %v268
        %v275 = vmax.f32 %v260, %v268
        %v276 = vmin.f32 %v261, %v270
        %v277 = vmax.f32 %v261, %v270
        %v278 = vmin.f32 %v269, %v263
        %v279 = vmax.f32 %v269, %v263
        %v280 = vmin.f32 %v272, %v274
        %v281 = vmax.f32 %v272, %v274
        %v282 = vmin.f32 %v275, %v273
        %v283 = vmax.f32 %v275, %v273
        %v284 = vmin.f32 %v276, %v278
        %v285 = vmax.f32 %v276, %v278
        %v286 = vmin.f32 %v279, %v277
        %v287 = vmax.f32 %v279, %v277
        %v288 = vmin.f32 %v281, %v282
        %v289 = vmax.f32 %v281, %v282
        %v290 = vmin.f32 %v284, %v283
        %v291 = vmax.f32 %v284, %v283
        %v292 = vmin.f32 %v285, %v286
        %v293 = vmax.f32 %v285, %v286
        %v294 = vmin.f32 %v289, %v290
        %v295 = vmax.f32 %v289, %v290
        %v296 = vmin.f32 %v291, %v292
        %v297 = vmax.f32 %v291, %v292
        %vm298 = vcmask 7168
        %v299 = vsel %vm298, %v266, %v280
        %vm300 = vcmask 15360
        %v301 = vsel %vm300, %v299, %v288
        %vm302 = vcmask 23552
        %v303 = vsel %vm302, %v301, %v294
        %vm304 = vcmask 31744
        %v305 = vsel %vm304, %v303, %v295
        %vm306 = vcmask 39936
        %v307 = vsel %vm306, %v305, %v296
        %vm308 = vcmask 48128
        %v309 = vsel %vm308, %v307, %v297
        %vm310 = vcmask 56320
        %v311 = vsel %vm310, %v309, %v293
        %vm312 = vcmask 64512
        %v313 = vsel %vm312, %v311, %v287
        %vm314 = vcmask 72704
        %v315 = vsel %vm314, %v313, %v271
        %vm316 = vcmask 80896
        %317 = vst.msk [vmem:[%s147] sm:$0xff] %vm316, %v315
        %s318 = sand.u32 %s76, 1
        %s319 = scalar_lea.sflag [#allocation3], %s318
        %s320 = sand.u32 %s76, 1
        %s321 = smul.addr %s320, 8
        %s322 = scalar_lea.vmem [#allocation2], %s321
        // Predicated region
        $region29: #{tpu_custom_call.1} parent=27 // pred_check
          %p323 = pneg %p86
        $region30: #{tpu_custom_call.1} parent=27 // pred_check_branch
          %325 = sbr.rel (%p323) target = $region32
        $region31: #{tpu_custom_call.1} parent=27 // pred_region
          %s327 = ssub.s32 128, 128
          %328 = vsyncadd %s319, %s327
          %s329 = smul.addr %s16, 128
          %s330 = scalar_lea.hbm %s2, %s329
          %s332 = sshll.u32 %s322, 4
          %s333 = int_to_ptr.vmem [resolvable:$true] %s332
          %335 = dma.vmem_to_hbm [thread:$0]  %s333, 128, %s330, %s319
        $region32: #{tpu_custom_call.1} parent=27 // pred_fallthru
          _
      $region28: #{tpu_custom_call.1} parent=5 // pred_fallthru
        _
      %p336 = scmp.le.s32.totalorder 2, %s11
      // Predicated region
      $region33: #{tpu_custom_call.1} parent=5 // pred_check
        %p337 = pneg %p336
      $region34: #{tpu_custom_call.1} parent=5 // pred_check_branch
        %339 = sbr.rel (%p337) target = $region36
      $region35: #{tpu_custom_call.1} parent=5 // pred_region
        %s340 = ssub.s32 %s11, 2
        // Predicated region
        $region37: #{tpu_custom_call.1} parent=35 // pred_check
          %p341 = pneg %p92
        $region38: #{tpu_custom_call.1} parent=35 // pred_check_branch
          %343 = sbr.rel (%p341) target = $region40
        $region39: #{tpu_custom_call.1} parent=35 // pred_region
          %s344 = sand.u32 %s77, 1
          %s345 = scalar_lea.sflag [#allocation3], %s344
          %s346 = sand.u32 %s77, 1
          %s347 = smul.addr %s346, 8
          %s348 = scalar_lea.vmem [#allocation2], %s347
          %349 = dma.done %s345, 128
        $region40: #{tpu_custom_call.1} parent=35 // pred_fallthru
          _
      $region36: #{tpu_custom_call.1} parent=5 // pred_fallthru
        _
    $region6: #{tpu_custom_call.1} parent=1 // loop_footer
      %s15 = sadd.s32 1, %s11
    $region7: #{tpu_custom_call.1} parent=1 // loop_footer_branch
      %10 = sbr.rel target = $region3
    $region8: #{tpu_custom_call.1} parent=1 // loop_exit
      _
    %350 = vsyncpa [#allocation3], 1
    %s351 = scalar_lea.sflag [#allocation3], 1
    %352 = vsyncpa %s351, 1

</llo_original>
